<compile_context>
chip_gen: v7x
topology: tpu7x:2x2x1
jax: 0.10.0
libtpu: 0.0.40
codegen_flags: <defaults>
</compile_context>

<pallas_src>
import functools

import jax
import jax.numpy as jnp
from jax.experimental import pallas as pl
from jax.experimental.pallas import tpu as pltpu


def _encoder_kernel(x_ref, w1_ref, b1_ref, w2_ref, b2_ref, o_ref):
    """Fused: h = relu(x @ W1 + b1); logits = h @ W2 + b2; softmax(logits, -1)."""
    # Cast the activation tile to bf16 for the MXU; f32 accumulation.
    x = x_ref[...].astype(jnp.bfloat16)                               # (TB, 784)
    h = jnp.dot(x, w1_ref[...], preferred_element_type=jnp.float32)  # (TB, 30) f32
    h = jnp.maximum(h + b1_ref[...], 0.0)                             # bias + ReLU (f32)
    logits = jnp.dot(h.astype(jnp.bfloat16), w2_ref[...],
                     preferred_element_type=jnp.float32) + b2_ref[...]  # (TB, n) f32
    m = jnp.max(logits, axis=-1, keepdims=True)
    e = jnp.exp(logits - m)
    # Exact normalization so every row sums to 1 up to f32 rounding.
    o_ref[...] = e / jnp.sum(e, axis=-1, keepdims=True)


def _round_up(v, m):
    return ((v + m - 1) // m) * m


@functools.partial(jax.jit, static_argnames=("n",))
def mnist_encoder_forward(x, w1, b1, w2, b2, *, n):
    """x: float32 array of shape (..., C, H, W) with C*H*W == 784.

    Returns softmax probabilities of shape x.shape[:-3] + (n,).
    """
    original_shape = x.shape
    lead_shape = original_shape[:-3]
    x_flat = x.reshape(-1, 784).astype(jnp.float32)
    b = x_flat.shape[0]

    # Weights are tiny (~95 KB): cast once to bf16 for the MXU. Biases stay f32
    # (added after the f32 accumulation).
    w1 = w1.astype(jnp.bfloat16)
    w2 = w2.astype(jnp.bfloat16)
    b1 = b1.astype(jnp.float32)
    b2 = b2.astype(jnp.float32)

    # Batch tile (static under jit, derived from shapes):
    #  * b <= 1024: single tile rounded up to a sublane multiple of 8.
    #  * b  > 1024: up to 2048 rows, but never fewer than 2 grid steps so the
    #    parallel axis spans both TensorCores on v7x.
    # x buffer is (TB, 784->896 lanes) f32: TB=2048 => ~7.3 MiB/buffer,
    # ~14.7 MiB double-buffered — comfortably under every chip's VMEM once the
    # scoped limit is raised (needed only on v5e's 16 MiB default).
    if b <= 1024:
        TB = max(8, _round_up(b, 8))
    else:
        TB = min(2048, _round_up(pl.cdiv(b, 2), 8))
    grid = (pl.cdiv(b, TB),)

    compiler_kwargs = dict(dimension_semantics=("parallel",))  # megacore on v7x
    if TB > 1024:
        # Raise the scoped-VMEM cap for the large tile (v5e default is 16 MiB);
        # 48 MiB is still under v7x's 64 MiB physical VMEM.
        compiler_kwargs["vmem_limit_bytes"] = 48 << 20

    out = pl.pallas_call(
        _encoder_kernel,
        out_shape=jax.ShapeDtypeStruct((b, n), jnp.float32),
        grid=grid,
        in_specs=[
            pl.BlockSpec((TB, 784), lambda i: (i, 0)),   # x: batch-tiled, pipelined
            pl.BlockSpec((784, 30), lambda i: (0, 0)),   # W1 (bf16): VMEM-resident
            pl.BlockSpec((1, 30),   lambda i: (0, 0)),   # b1: resident
            pl.BlockSpec((30, n),   lambda i: (0, 0)),   # W2 (bf16): resident
            pl.BlockSpec((1, n),    lambda i: (0, 0)),   # b2: resident
        ],
        out_specs=pl.BlockSpec((TB, n), lambda i: (i, 0)),
        compiler_params=pltpu.CompilerParams(**compiler_kwargs),
    )(x_flat, w1, b1, w2, b2)

    return out.reshape(*lead_shape, n)


def init_params(n, key):
    """Deterministic parameter init matching nn.Linear shapes.

    PyTorch stores Linear weight as (out, in); we keep (in, out) for the kernel.
    """
    k1, k2, k3, k4 = jax.random.split(key, 4)
    lim1 = 1.0 / jnp.sqrt(784.0)
    lim2 = 1.0 / jnp.sqrt(30.0)
    w1 = jax.random.uniform(k1, (784, 30), jnp.float32, -lim1, lim1)
    b1 = jax.random.uniform(k2, (1, 30), jnp.float32, -lim1, lim1)
    w2 = jax.random.uniform(k3, (30, n), jnp.float32, -lim2, lim2)
    b2 = jax.random.uniform(k4, (1, n), jnp.float32, -lim2, lim2)
    return w1, b1, w2, b2


def _reference(x, w1, b1, w2, b2, n):
    lead = x.shape[:-3]
    xf = x.reshape(-1, 784)
    h = jnp.maximum(xf @ w1 + b1, 0.0)
    return jax.nn.softmax(h @ w2 + b2, axis=-1).reshape(*lead, n)


if __name__ == "__main__":
    n = 10
    key = jax.random.PRNGKey(0)
    k_x, k_x2, k_p = jax.random.split(key, 3)
    w1, b1, w2, b2 = init_params(n, k_p)

    # Case 1: standard MNIST-like batch (NCHW), batch=2 (ragged, < 8 rows).
    x = jax.random.normal(k_x, (2, 1, 28, 28), jnp.float32)
    out = mnist_encoder_forward(x, w1, b1, w2, b2, n=n)
    out = jax.block_until_ready(out)
    ref = _reference(x, w1, b1, w2, b2, n)
    assert out.shape == (2, n), out.shape
    # bf16 matmul operands => allow ~1e-2-level deviation vs the f32 reference.
    assert jnp.allclose(out, ref, atol=2e-2), float(jnp.max(jnp.abs(out - ref)))
    # Exact divide in the kernel => rows sum to 1 to f32 rounding.
    assert jnp.allclose(jnp.sum(out, axis=-1), 1.0, atol=1e-4)

    # Case 2: extra leading dims + batch (15) not a multiple of 8 (ragged tile).
    x2 = jax.random.normal(k_x2, (3, 5, 1, 28, 28), jnp.float32)
    out2 = mnist_encoder_forward(x2, w1, b1, w2, b2, n=n)
    out2 = jax.block_until_ready(out2)
    ref2 = _reference(x2, w1, b1, w2, b2, n)
    assert out2.shape == (3, 5, n), out2.shape
    assert jnp.allclose(out2, ref2, atol=2e-2), float(jnp.max(jnp.abs(out2 - ref2)))
    assert jnp.allclose(jnp.sum(out2, axis=-1), 1.0, atol=1e-4)

    print("KERNEL_OK")
</pallas_src>

<mosaic_0001>
module attributes {stable_mosaic.version = 11 : i64} {
  func.func @_encoder_kernel(%arg0: i32, %arg1: memref<8x784xf32, #tpu.memory_space<vmem>>, %arg2: memref<784x30xbf16, #tpu.memory_space<vmem>>, %arg3: memref<1x30xf32, #tpu.memory_space<vmem>>, %arg4: memref<30x10xbf16, #tpu.memory_space<vmem>>, %arg5: memref<1x10xf32, #tpu.memory_space<vmem>>, %arg6: memref<8x10xf32, #tpu.memory_space<vmem>>) attributes {dimension_semantics = [#tpu.dimension_semantics<parallel>], iteration_bounds = array<i64: 1>, scalar_prefetch = 0 : i64, scratch_operands = 0 : i64, tpu.core_type = #tpu.core_type<tc>, window_params = [{transform_indices = @transform_0, window_bounds = array<i64: 8, 784>}, {pipeline_mode = #tpu.pipeline_mode<synchronous>, transform_indices = @transform_1, window_bounds = array<i64: 784, 30>}, {pipeline_mode = #tpu.pipeline_mode<synchronous>, transform_indices = @transform_2, window_bounds = array<i64: 1, 30>}, {pipeline_mode = #tpu.pipeline_mode<synchronous>, transform_indices = @transform_3, window_bounds = array<i64: 30, 10>}, {pipeline_mode = #tpu.pipeline_mode<synchronous>, transform_indices = @transform_4, window_bounds = array<i64: 1, 10>}, {transform_indices = @transform_5, window_bounds = array<i64: 8, 10>}]} {
    %c0 = arith.constant 0 : index
    %c0_0 = arith.constant 0 : index
    %0 = vector.load %arg1[%c0, %c0_0] : memref<8x784xf32, #tpu.memory_space<vmem>>, vector<8x784xf32>
    %1 = arith.truncf %0 : vector<8x784xf32> to vector<8x784xbf16>
    %c0_1 = arith.constant 0 : index
    %c0_2 = arith.constant 0 : index
    %2 = vector.load %arg2[%c0_1, %c0_2] : memref<784x30xbf16, #tpu.memory_space<vmem>>, vector<784x30xbf16>
    %cst = arith.constant dense<0.000000e+00> : vector<8x30xf32>
    %3 = tpu.matmul %1, %2, %cst {dimension_numbers = #tpu.dot_dimension_numbers<[1], [0], [0], [1], [0, 0, 1, 1], [], []>} : vector<8x784xbf16>, vector<784x30xbf16>, vector<8x30xf32> -> vector<8x30xf32>
    %c0_3 = arith.constant 0 : index
    %c0_4 = arith.constant 0 : index
    %4 = vector.load %arg3[%c0_3, %c0_4] : memref<1x30xf32, #tpu.memory_space<vmem>>, vector<1x30xf32>
    %5 = vector.broadcast %4 : vector<1x30xf32> to vector<8x30xf32>
    %6 = arith.addf %3, %5 : vector<8x30xf32>
    %cst_5 = arith.constant 0.000000e+00 : f32
    %7 = vector.broadcast %cst_5 : f32 to vector<8x30xf32>
    %8 = arith.maximumf %6, %7 : vector<8x30xf32>
    %9 = arith.truncf %8 : vector<8x30xf32> to vector<8x30xbf16>
    %c0_6 = arith.constant 0 : index
    %c0_7 = arith.constant 0 : index
    %10 = vector.load %arg4[%c0_6, %c0_7] : memref<30x10xbf16, #tpu.memory_space<vmem>>, vector<30x10xbf16>
    %cst_8 = arith.constant dense<0.000000e+00> : vector<8x10xf32>
    %11 = tpu.matmul %9, %10, %cst_8 {dimension_numbers = #tpu.dot_dimension_numbers<[1], [0], [0], [1], [0, 0, 1, 1], [], []>} : vector<8x30xbf16>, vector<30x10xbf16>, vector<8x10xf32> -> vector<8x10xf32>
    %c0_9 = arith.constant 0 : index
    %c0_10 = arith.constant 0 : index
    %12 = vector.load %arg5[%c0_9, %c0_10] : memref<1x10xf32, #tpu.memory_space<vmem>>, vector<1x10xf32>
    %13 = vector.broadcast %12 : vector<1x10xf32> to vector<8x10xf32>
    %14 = arith.addf %11, %13 : vector<8x10xf32>
    %cst_11 = arith.constant dense<0xFF800000> : vector<8xf32>
    %15 = vector.multi_reduction <maximumf>, %14, %cst_11 [1] : vector<8x10xf32> to vector<8xf32>
    %16 = vector.shape_cast %15 : vector<8xf32> to vector<8x1xf32>
    %17 = vector.broadcast %16 : vector<8x1xf32> to vector<8x10xf32>
    %18 = arith.subf %14, %17 : vector<8x10xf32>
    %19 = math.exp %18 : vector<8x10xf32>
    %cst_12 = arith.constant dense<0.000000e+00> : vector<8xf32>
    %20 = vector.multi_reduction <add>, %19, %cst_12 [1] : vector<8x10xf32> to vector<8xf32>
    %21 = vector.shape_cast %20 : vector<8xf32> to vector<8x1xf32>
    %22 = vector.broadcast %21 : vector<8x1xf32> to vector<8x10xf32>
    %23 = arith.divf %19, %22 : vector<8x10xf32>
    %c0_13 = arith.constant 0 : index
    %c0_14 = arith.constant 0 : index
    %24 = vector.load %arg6[%c0_13, %c0_14] : memref<8x10xf32, #tpu.memory_space<vmem>>, vector<8x10xf32>
    tpu.vector_store %arg6[%c0_13, %c0_14], %23 {strides = array<i32>} : memref<8x10xf32, #tpu.memory_space<vmem>>, vector<8x10xf32>,
    return
  }
  func.func @transform_0(%arg0: i32) -> (i32, i32) {
    %c0_i32 = arith.constant 0 : i32
    %c0_i32_0 = arith.constant 0 : i32
    return %arg0, %c0_i32 : i32, i32
  }
  func.func @transform_1(%arg0: i32) -> (i32, i32) {
    %c0_i32 = arith.constant 0 : i32
    %c0_i32_0 = arith.constant 0 : i32
    %c0_i32_1 = arith.constant 0 : i32
    return %c0_i32, %c0_i32_0 : i32, i32
  }
  func.func @transform_2(%arg0: i32) -> (i32, i32) {
    %c0_i32 = arith.constant 0 : i32
    %c0_i32_0 = arith.constant 0 : i32
    %c0_i32_1 = arith.constant 0 : i32
    return %c0_i32, %c0_i32_0 : i32, i32
  }
  func.func @transform_3(%arg0: i32) -> (i32, i32) {
    %c0_i32 = arith.constant 0 : i32
    %c0_i32_0 = arith.constant 0 : i32
    %c0_i32_1 = arith.constant 0 : i32
    return %c0_i32, %c0_i32_0 : i32, i32
  }
  func.func @transform_4(%arg0: i32) -> (i32, i32) {
    %c0_i32 = arith.constant 0 : i32
    %c0_i32_0 = arith.constant 0 : i32
    %c0_i32_1 = arith.constant 0 : i32
    return %c0_i32, %c0_i32_0 : i32, i32
  }
  func.func @transform_5(%arg0: i32) -> (i32, i32) {
    %c0_i32 = arith.constant 0 : i32
    %c0_i32_0 = arith.constant 0 : i32
    return %arg0, %c0_i32 : i32, i32
  }
}

</mosaic_0001>

<llo_original>
// kernel: mnist_encoder_forward.1
$region0: #{mnist_encoder_forward.1}
  #allocation0 [shape = 'u32[]', space=smem, size = 0x4, offset = 0x4, fixed_abs, tag = 'smem constant byte address 0x4 - core index']
  #allocation1 [shape = 'u32[144,128]{1,0:T(1,128)}', space=vmem, size = 0x12000, scoped, tag = 'internal scratch']
  %s0 = inlined_call_operand.vmem [shape: f32[2,784], index: 0, kind: input, shape index: {}]
  %s1 = inlined_call_operand.vmem [shape: bf16[784,30], index: 1, kind: input, shape index: {}]
  %s2 = inlined_call_operand.vmem [shape: f32[1,30], index: 2, kind: input, shape index: {}]
  %s3 = inlined_call_operand.vmem [shape: bf16[30,10], index: 3, kind: input, shape index: {}]
  %s4 = inlined_call_operand.vmem [shape: f32[1,10], index: 4, kind: input, shape index: {}]
  %s5 = inlined_call_operand.hbm [shape: f32[2,10], index: 5, kind: output, shape index: {}]
  %s6 = sld [smem:[#allocation0]]
  $region30: #{mnist_encoder_forward.1} parent=0
    _
  %s8 = ssub.s32 1, %s6
  %s9 = scalar_select 0, %s8, %s6
  $region1: #{mnist_encoder_forward.1} parent=0
    #allocation2 [shape = 'u8[4096]{0}', space=vmem, size = 0x1000, scoped, tag = 'output window, operand 0, single buffered']
    #allocation3 [shape = 's32[1]{0}', space=sflag, size = 0x4, scoped, tag = 'scoped memory for mnist_encoder_forward.1']
    %10 = vsyncpa [#allocation3], 0
    // Predicated region
    $region2: #{mnist_encoder_forward.1} parent=1 // pred_check
      _
    $region3: #{mnist_encoder_forward.1} parent=1 // pred_check_branch
      %12 = sbr.rel (0) target = $region5
    $region4: #{mnist_encoder_forward.1} parent=1 // pred_region
      _
    $region5: #{mnist_encoder_forward.1} parent=1 // pred_fallthru
      _
    // Predicated region
    $region6: #{mnist_encoder_forward.1} parent=1 // pred_check
      _
    $region7: #{mnist_encoder_forward.1} parent=1 // pred_check_branch
      %14 = sbr.rel (0) target = $region9
    $region8: #{mnist_encoder_forward.1} parent=1 // pred_region
      _
    $region9: #{mnist_encoder_forward.1} parent=1 // pred_fallthru
      _
    // Predicated region
    $region10: #{mnist_encoder_forward.1} parent=1 // pred_check
      _
    $region11: #{mnist_encoder_forward.1} parent=1 // pred_check_branch
      %16 = sbr.rel (0) target = $region13
    $region12: #{mnist_encoder_forward.1} parent=1 // pred_region
      _
    $region13: #{mnist_encoder_forward.1} parent=1 // pred_fallthru
      _
    // Predicated region
    $region14: #{mnist_encoder_forward.1} parent=1 // pred_check
      _
    $region15: #{mnist_encoder_forward.1} parent=1 // pred_check_branch
      %18 = sbr.rel (0) target = $region17
    $region16: #{mnist_encoder_forward.1} parent=1 // pred_region
      _
    $region17: #{mnist_encoder_forward.1} parent=1 // pred_fallthru
      _
    // Predicated region
    $region18: #{mnist_encoder_forward.1} parent=1 // pred_check
      _
    $region19: #{mnist_encoder_forward.1} parent=1 // pred_check_branch
      %20 = sbr.rel (0) target = $region21
    $region20: #{mnist_encoder_forward.1} parent=1 // pred_region
      _
    $region21: #{mnist_encoder_forward.1} parent=1 // pred_fallthru
      _
    %v22 = vld [vmem:[%s0] sm:$0xff]
    %v23 = vld [vmem:[%s0 + $0x8] sm:$0x3f]
    %v24 = vld [vmem:[%s0 + $0xe] sm:$0xff]
    %v25 = vld [vmem:[%s0 + $0x16] sm:$0x3f]
    %v26 = vld [vmem:[%s0 + $0x1c] sm:$0xff]
    %v27 = vld [vmem:[%s0 + $0x24] sm:$0x3f]
    %v28 = vld [vmem:[%s0 + $0x2a] sm:$0xff]
    %v29 = vld [vmem:[%s0 + $0x32] sm:$0x3f]
    %v38 = vcombine.low %v22, %v24
    %v39 = vcombine.high %v22, %v24
    %v40 = vcombine.low %v26, %v28
    %v41 = vcombine.high %v26, %v28
    %v43 = vunpack.c.l.s4 1983009808
    %v44 = vunpack.c.0.s8 %v43
    %v45 = vlaneseq
    %v46 = vshrl.u32 %v45, 7
    %v47 = vsub.s32 %v44, %v46
    %v48 = vrot.slane %v38, %v47
    %v50 = vunpack.c.l.s4 1983009808
    %v51 = vunpack.c.0.s8 %v50
    %v52 = vlaneseq
    %v53 = vshrl.u32 %v52, 7
    %v54 = vsub.s32 %v51, %v53
    %v55 = vrot.slane %v39, %v54
    %v57 = vunpack.c.l.s4 1983009808
    %v58 = vunpack.c.0.s8 %v57
    %v59 = vlaneseq
    %v60 = vshrl.u32 %v59, 7
    %v61 = vsub.s32 %v58, %v60
    %v62 = vrot.slane %v40, %v61
    %v64 = vunpack.c.l.s4 1983009808
    %v65 = vunpack.c.0.s8 %v64
    %v66 = vlaneseq
    %v67 = vshrl.u32 %v66, 7
    %v68 = vsub.s32 %v65, %v67
    %v69 = vrot.slane %v41, %v68
    %v70 = vcombine.low %v48, %v62
    %v71 = vcombine.high %v48, %v62
    %v72 = vcombine.low %v55, %v69
    %v73 = vcombine.high %v55, %v69
    %v74 = vcombine.low %v23, %v25
    %v75 = vcombine.high %v23, %v25
    %v76 = vcombine.low %v27, %v29
    %v77 = vcombine.high %v27, %v29
    %v79 = vunpack.c.l.s4 1983009808
    %v80 = vunpack.c.0.s8 %v79
    %v81 = vlaneseq
    %v82 = vshrl.u32 %v81, 7
    %v83 = vsub.s32 %v80, %v82
    %v84 = vrot.slane %v74, %v83
    %v86 = vunpack.c.l.s4 1983009808
    %v87 = vunpack.c.0.s8 %v86
    %v88 = vlaneseq
    %v89 = vshrl.u32 %v88, 7
    %v90 = vsub.s32 %v87, %v89
    %v91 = vrot.slane %v75, %v90
    %v93 = vunpack.c.l.s4 1983009808
    %v94 = vunpack.c.0.s8 %v93
    %v95 = vlaneseq
    %v96 = vshrl.u32 %v95, 7
    %v97 = vsub.s32 %v94, %v96
    %v98 = vrot.slane %v76, %v97
    %v100 = vunpack.c.l.s4 1983009808
    %v101 = vunpack.c.0.s8 %v100
    %v102 = vlaneseq
    %v103 = vshrl.u32 %v102, 7
    %v104 = vsub.s32 %v101, %v103
    %v105 = vrot.slane %v77, %v104
    %v106 = vcombine.low %v84, %v98
    %v107 = vcombine.high %v84, %v98
    %v108 = vcombine.low %v91, %v105
    %v116 = vpack.c.bf16 %v70, %v70
    %v117 = vpack.c.bf16 %v71, %v71
    %v118 = vpack.c.bf16 %v72, %v72
    %v119 = vpack.c.bf16 %v73, %v73
    %v120 = vpack.c.bf16 %v106, %v106
    %v121 = vpack.c.bf16 %v107, %v107
    %v122 = vpack.c.bf16 %v108, %v108
    %v123 = vld [vmem:[%s1] sm:$0xf]
    %v124 = vld [vmem:[%s1 + $0x4] sm:$0xf]
    %v125 = vld [vmem:[%s1 + $0x8] sm:$0xf]
    %v126 = vld [vmem:[%s1 + $0xc] sm:$0xf]
    %v127 = vld [vmem:[%s1 + $0x10] sm:$0xf]
    %v128 = vld [vmem:[%s1 + $0x14] sm:$0xf]
    %v129 = vld [vmem:[%s1 + $0x18] sm:$0xf]
    %v130 = vld [vmem:[%s1 + $0x1c] sm:$0xf]
    %v131 = vld [vmem:[%s1 + $0x20] sm:$0xf]
    %v132 = vld [vmem:[%s1 + $0x24] sm:$0xf]
    %v133 = vld [vmem:[%s1 + $0x28] sm:$0xf]
    %v134 = vld [vmem:[%s1 + $0x2c] sm:$0xf]
    %v135 = vld [vmem:[%s1 + $0x30] sm:$0xf]
    %v136 = vld [vmem:[%s1 + $0x34] sm:$0xf]
    %v137 = vld [vmem:[%s1 + $0x38] sm:$0xf]
    %v138 = vld [vmem:[%s1 + $0x3c] sm:$0xf]
    %v139 = vld [vmem:[%s1 + $0x40] sm:$0xf]
    %v140 = vld [vmem:[%s1 + $0x44] sm:$0xf]
    %v141 = vld [vmem:[%s1 + $0x48] sm:$0xf]
    %v142 = vld [vmem:[%s1 + $0x4c] sm:$0xf]
    %v143 = vld [vmem:[%s1 + $0x50] sm:$0xf]
    %v144 = vld [vmem:[%s1 + $0x54] sm:$0xf]
    %v145 = vld [vmem:[%s1 + $0x58] sm:$0xf]
    %v146 = vld [vmem:[%s1 + $0x5c] sm:$0xf]
    %v147 = vld [vmem:[%s1 + $0x60] sm:$0xf]
    %v148 = vld [vmem:[%s1 + $0x64] sm:$0xf]
    %v149 = vld [vmem:[%s1 + $0x68] sm:$0xf]
    %v150 = vld [vmem:[%s1 + $0x6c] sm:$0xf]
    %v151 = vld [vmem:[%s1 + $0x70] sm:$0xf]
    %v152 = vld [vmem:[%s1 + $0x74] sm:$0xf]
    %v153 = vld [vmem:[%s1 + $0x78] sm:$0xf]
    %v154 = vld [vmem:[%s1 + $0x7c] sm:$0xf]
    %v155 = vld [vmem:[%s1 + $0x80] sm:$0xf]
    %v156 = vld [vmem:[%s1 + $0x84] sm:$0xf]
    %v157 = vld [vmem:[%s1 + $0x88] sm:$0xf]
    %v158 = vld [vmem:[%s1 + $0x8c] sm:$0xf]
    %v159 = vld [vmem:[%s1 + $0x90] sm:$0xf]
    %v160 = vld [vmem:[%s1 + $0x94] sm:$0xf]
    %v161 = vld [vmem:[%s1 + $0x98] sm:$0xf]
    %v162 = vld [vmem:[%s1 + $0x9c] sm:$0xf]
    %v163 = vld [vmem:[%s1 + $0xa0] sm:$0xf]
    %v164 = vld [vmem:[%s1 + $0xa4] sm:$0xf]
    %v165 = vld [vmem:[%s1 + $0xa8] sm:$0xf]
    %v166 = vld [vmem:[%s1 + $0xac] sm:$0xf]
    %v167 = vld [vmem:[%s1 + $0xb0] sm:$0xf]
    %v168 = vld [vmem:[%s1 + $0xb4] sm:$0xf]
    %v169 = vld [vmem:[%s1 + $0xb8] sm:$0xf]
    %v170 = vld [vmem:[%s1 + $0xbc] sm:$0xf]
    %v171 = vld [vmem:[%s1 + $0xc0] sm:$0xf]
    %v172 = vld [vmem:[%s1 + $0xc4] sm:$0xf]
    %v173 = vld [vmem:[%s1 + $0xc8] sm:$0xf]
    %v174 = vld [vmem:[%s1 + $0xcc] sm:$0xf]
    %v175 = vld [vmem:[%s1 + $0xd0] sm:$0xf]
    %v176 = vld [vmem:[%s1 + $0xd4] sm:$0xf]
    %v177 = vld [vmem:[%s1 + $0xd8] sm:$0xf]
    %v178 = vld [vmem:[%s1 + $0xdc] sm:$0xf]
    %v179 = vld [vmem:[%s1 + $0xe0] sm:$0xf]
    %v180 = vld [vmem:[%s1 + $0xe4] sm:$0xf]
    %v181 = vld [vmem:[%s1 + $0xe8] sm:$0xf]
    %v182 = vld [vmem:[%s1 + $0xec] sm:$0xf]
    %v183 = vld [vmem:[%s1 + $0xf0] sm:$0xf]
    %v184 = vld [vmem:[%s1 + $0xf4] sm:$0xf]
    %v185 = vld [vmem:[%s1 + $0xf8] sm:$0xf]
    %v186 = vld [vmem:[%s1 + $0xfc] sm:$0xf]
    %v187 = vld [vmem:[%s1 + $0x100] sm:$0xf]
    %v188 = vld [vmem:[%s1 + $0x104] sm:$0xf]
    %v189 = vld [vmem:[%s1 + $0x108] sm:$0xf]
    %v190 = vld [vmem:[%s1 + $0x10c] sm:$0xf]
    %v191 = vld [vmem:[%s1 + $0x110] sm:$0xf]
    %v192 = vld [vmem:[%s1 + $0x114] sm:$0xf]
    %v193 = vld [vmem:[%s1 + $0x118] sm:$0xf]
    %v194 = vld [vmem:[%s1 + $0x11c] sm:$0xf]
    %v195 = vld [vmem:[%s1 + $0x120] sm:$0xf]
    %v196 = vld [vmem:[%s1 + $0x124] sm:$0xf]
    %v197 = vld [vmem:[%s1 + $0x128] sm:$0xf]
    %v198 = vld [vmem:[%s1 + $0x12c] sm:$0xf]
    %v199 = vld [vmem:[%s1 + $0x130] sm:$0xf]
    %v200 = vld [vmem:[%s1 + $0x134] sm:$0xf]
    %v201 = vld [vmem:[%s1 + $0x138] sm:$0xf]
    %v202 = vld [vmem:[%s1 + $0x13c] sm:$0xf]
    %v203 = vld [vmem:[%s1 + $0x140] sm:$0xf]
    %v204 = vld [vmem:[%s1 + $0x144] sm:$0xf]
    %v205 = vld [vmem:[%s1 + $0x148] sm:$0xf]
    %v206 = vld [vmem:[%s1 + $0x14c] sm:$0xf]
    %v207 = vld [vmem:[%s1 + $0x150] sm:$0xf]
    %v208 = vld [vmem:[%s1 + $0x154] sm:$0xf]
    %v209 = vld [vmem:[%s1 + $0x158] sm:$0xf]
    %v210 = vld [vmem:[%s1 + $0x15c] sm:$0xf]
    %v211 = vld [vmem:[%s1 + $0x160] sm:$0xf]
    %v212 = vld [vmem:[%s1 + $0x164] sm:$0xf]
    %v213 = vld [vmem:[%s1 + $0x168] sm:$0xf]
    %v214 = vld [vmem:[%s1 + $0x16c] sm:$0xf]
    %v215 = vld [vmem:[%s1 + $0x170] sm:$0xf]
    %v216 = vld [vmem:[%s1 + $0x174] sm:$0xf]
    %v217 = vld [vmem:[%s1 + $0x178] sm:$0xf]
    %v218 = vld [vmem:[%s1 + $0x17c] sm:$0xf]
    %v219 = vld [vmem:[%s1 + $0x180] sm:$0xf]
    %v220 = vld [vmem:[%s1 + $0x184] sm:$0xf]
    %v221 = vld [vmem:[%s2] sm:$0x1]
    %v223 = vlaneseq
    %v224 = vshrl.u32 %v223, 7
    %v225 = vsub.s32 0, %v224
    %v226 = vrot.slane %v221, %v225
    %v326 = vunpack.c.l.b16 %v123
    %v327 = vunpack.c.l.b16 %v124
    %v328 = vunpack.c.l.b16 %v125
    %v329 = vunpack.c.l.b16 %v126
    %v330 = vunpack.c.l.b16 %v127
    %v331 = vunpack.c.l.b16 %v128
    %v332 = vunpack.c.l.b16 %v129
    %v333 = vunpack.c.l.b16 %v130
    %v334 = vunpack.c.l.b16 %v131
    %v335 = vunpack.c.l.b16 %v132
    %v336 = vunpack.c.l.b16 %v133
    %v337 = vunpack.c.l.b16 %v134
    %v338 = vunpack.c.l.b16 %v135
    %v339 = vunpack.c.l.b16 %v136
    %v340 = vunpack.c.l.b16 %v137
    %v341 = vunpack.c.l.b16 %v138
    %v342 = vunpack.c.l.b16 %v139
    %v343 = vunpack.c.l.b16 %v140
    %v344 = vunpack.c.l.b16 %v141
    %v345 = vunpack.c.l.b16 %v142
    %v346 = vunpack.c.l.b16 %v143
    %v347 = vunpack.c.l.b16 %v144
    %v348 = vunpack.c.l.b16 %v145
    %v349 = vunpack.c.l.b16 %v146
    %v350 = vunpack.c.l.b16 %v147
    %v351 = vunpack.c.l.b16 %v148
    %v352 = vunpack.c.l.b16 %v149
    %v353 = vunpack.c.l.b16 %v150
    %v354 = vunpack.c.l.b16 %v151
    %v355 = vunpack.c.l.b16 %v152
    %v356 = vunpack.c.l.b16 %v153
    %v357 = vunpack.c.l.b16 %v154
    %v358 = vunpack.c.l.b16 %v155
    %v359 = vunpack.c.l.b16 %v156
    %v360 = vunpack.c.l.b16 %v157
    %v361 = vunpack.c.l.b16 %v158
    %v362 = vunpack.c.l.b16 %v159
    %v363 = vunpack.c.l.b16 %v160
    %v364 = vunpack.c.l.b16 %v161
    %v365 = vunpack.c.l.b16 %v162
    %v366 = vunpack.c.l.b16 %v163
    %v367 = vunpack.c.l.b16 %v164
    %v368 = vunpack.c.l.b16 %v165
    %v369 = vunpack.c.l.b16 %v166
    %v370 = vunpack.c.l.b16 %v167
    %v371 = vunpack.c.l.b16 %v168
    %v372 = vunpack.c.l.b16 %v169
    %v373 = vunpack.c.l.b16 %v170
    %v374 = vunpack.c.l.b16 %v171
    %v375 = vunpack.c.l.b16 %v172
    %v376 = vunpack.c.l.b16 %v173
    %v377 = vunpack.c.l.b16 %v174
    %v378 = vunpack.c.l.b16 %v175
    %v379 = vunpack.c.l.b16 %v176
    %v380 = vunpack.c.l.b16 %v177
    %v381 = vunpack.c.l.b16 %v178
    %v382 = vunpack.c.l.b16 %v179
    %v383 = vunpack.c.l.b16 %v180
    %v384 = vunpack.c.l.b16 %v181
    %v385 = vunpack.c.l.b16 %v182
    %v386 = vunpack.c.l.b16 %v183
    %v387 = vunpack.c.l.b16 %v184
    %v388 = vunpack.c.l.b16 %v185
    %v389 = vunpack.c.l.b16 %v186
    %v390 = vunpack.c.l.b16 %v187
    %v391 = vunpack.c.l.b16 %v188
    %v392 = vunpack.c.l.b16 %v189
    %v393 = vunpack.c.l.b16 %v190
    %v394 = vunpack.c.l.b16 %v191
    %v395 = vunpack.c.l.b16 %v192
    %v396 = vunpack.c.l.b16 %v193
    %v397 = vunpack.c.l.b16 %v194
    %v398 = vunpack.c.l.b16 %v195
    %v399 = vunpack.c.l.b16 %v196
    %v400 = vunpack.c.l.b16 %v197
    %v401 = vunpack.c.l.b16 %v198
    %v402 = vunpack.c.l.b16 %v199
    %v403 = vunpack.c.l.b16 %v200
    %v404 = vunpack.c.l.b16 %v201
    %v405 = vunpack.c.l.b16 %v202
    %v406 = vunpack.c.l.b16 %v203
    %v407 = vunpack.c.l.b16 %v204
    %v408 = vunpack.c.l.b16 %v205
    %v409 = vunpack.c.l.b16 %v206
    %v410 = vunpack.c.l.b16 %v207
    %v411 = vunpack.c.l.b16 %v208
    %v412 = vunpack.c.l.b16 %v209
    %v413 = vunpack.c.l.b16 %v210
    %v414 = vunpack.c.l.b16 %v211
    %v415 = vunpack.c.l.b16 %v212
    %v416 = vunpack.c.l.b16 %v213
    %v417 = vunpack.c.l.b16 %v214
    %v418 = vunpack.c.l.b16 %v215
    %v419 = vunpack.c.l.b16 %v216
    %v420 = vunpack.c.l.b16 %v217
    %v421 = vunpack.c.l.b16 %v218
    %v422 = vunpack.c.l.b16 %v219
    %v423 = vunpack.c.l.b16 %v220
    %v424 = vpack.c.b16 %v327, %v326
    %v425 = vpack.c.b16 %v329, %v328
    %v426 = vpack.c.b16 %v331, %v330
    %v427 = vpack.c.b16 %v333, %v332
    %v428 = vpack.c.b16 %v335, %v334
    %v429 = vpack.c.b16 %v337, %v336
    %v430 = vpack.c.b16 %v339, %v338
    %v431 = vpack.c.b16 %v341, %v340
    %v432 = vpack.c.b16 %v343, %v342
    %v433 = vpack.c.b16 %v345, %v344
    %v434 = vpack.c.b16 %v347, %v346
    %v435 = vpack.c.b16 %v349, %v348
    %v436 = vpack.c.b16 %v351, %v350
    %v437 = vpack.c.b16 %v353, %v352
    %v438 = vpack.c.b16 %v355, %v354
    %v439 = vpack.c.b16 %v357, %v356
    %v440 = vpack.c.b16 %v359, %v358
    %v441 = vpack.c.b16 %v361, %v360
    %v442 = vpack.c.b16 %v363, %v362
    %v443 = vpack.c.b16 %v365, %v364
    %v444 = vpack.c.b16 %v367, %v366
    %v445 = vpack.c.b16 %v369, %v368
    %v446 = vpack.c.b16 %v371, %v370
    %v447 = vpack.c.b16 %v373, %v372
    %v448 = vpack.c.b16 %v375, %v374
    %v449 = vpack.c.b16 %v377, %v376
    %v450 = vpack.c.b16 %v379, %v378
    %v451 = vpack.c.b16 %v381, %v380
    %v452 = vpack.c.b16 %v383, %v382
    %v453 = vpack.c.b16 %v385, %v384
    %v454 = vpack.c.b16 %v387, %v386
    %v455 = vpack.c.b16 %v389, %v388
    %v456 = vpack.c.b16 %v391, %v390
    %v457 = vpack.c.b16 %v393, %v392
    %v458 = vpack.c.b16 %v395, %v394
    %v459 = vpack.c.b16 %v397, %v396
    %v460 = vpack.c.b16 %v399, %v398
    %v461 = vpack.c.b16 %v401, %v400
    %v462 = vpack.c.b16 %v403, %v402
    %v463 = vpack.c.b16 %v405, %v404
    %v464 = vpack.c.b16 %v407, %v406
    %v465 = vpack.c.b16 %v409, %v408
    %v466 = vpack.c.b16 %v411, %v410
    %v467 = vpack.c.b16 %v413, %v412
    %v468 = vpack.c.b16 %v415, %v414
    %v469 = vpack.c.b16 %v417, %v416
    %v470 = vpack.c.b16 %v419, %v418
    %v471 = vpack.c.b16 %v421, %v420
    %v472 = vpack.c.b16 %v423, %v422
    %vm522 = vcmask 130048
    %v524 = vsel %vm522, %v122, 0
    %526 = vmatprep.subr.bf16.mxu0 0
    %527 = vmatpush1.bf16.msra.mxu0 %v424
    %528 = vmatprep.subr.bf16.mxu0 0
    %529 = vmatpush1.bf16.msra.mxu0 %v425
    %530 = vmatprep.subr.bf16.mxu0 0
    %531 = vmatpush1.bf16.msra.mxu0 %v426
    %532 = vmatprep.subr.bf16.mxu0 0
    %533 = vmatpush1.bf16.msra.mxu0 %v427
    %534 = vmatprep.subr.bf16.mxu0 0
    %535 = vmatpush1.bf16.msra.mxu0 %v428
    %536 = vmatprep.subr.bf16.mxu0 0
    %537 = vmatpush1.bf16.msra.mxu0 %v429
    %538 = vmatprep.subr.bf16.mxu0 0
    %539 = vmatpush1.bf16.msra.mxu0 %v430
    %540 = vmatprep.subr.bf16.mxu0 0
    %541 = vmatpush1.bf16.msra.mxu0 %v431
    %542 = vmatprep.subr.bf16.mxu0 0
    %543 = vmatpush1.bf16.msra.mxu0 %v432
    %544 = vmatprep.subr.bf16.mxu0 0
    %545 = vmatpush1.bf16.msra.mxu0 %v433
    %546 = vmatprep.subr.bf16.mxu0 0
    %547 = vmatpush1.bf16.msra.mxu0 %v434
    %548 = vmatprep.subr.bf16.mxu0 0
    %549 = vmatpush1.bf16.msra.mxu0 %v435
    %550 = vmatprep.subr.bf16.mxu0 0
    %551 = vmatpush1.bf16.msra.mxu0 %v436
    %552 = vmatprep.subr.bf16.mxu0 0
    %553 = vmatpush1.bf16.msra.mxu0 %v437
    %554 = vmatprep.subr.bf16.mxu0 0
    %555 = vmatpush1.bf16.msra.mxu0 %v438
    %556 = vmatprep.subr.bf16.mxu0 0
    %557 = vmatpush1.bf16.msra.mxu0 %v439
    %558 = vmatprep.mubr.bf16.mxu0 %v117
    %559 = vmatmul.mubr.bf16.gmra.mrb[0].mxu0 %v116
    %v560 = vpop.f32.mrb[0].mxu0
    %v561 = vadd.f32 %v226, %v560
    %v562 = vpop.f32.mrb[0].mxu0
    %v563 = vpop.f32.mrb[0].mxu0
    %v564 = vpop.f32.mrb[0].mxu0
    %565 = vdwg.mxu0
    %566 = vmatprep.subr.bf16.mxu0 0
    %567 = vmatpush1.bf16.msra.mxu0 %v440
    %568 = vmatprep.subr.bf16.mxu0 0
    %569 = vmatpush1.bf16.msra.mxu0 %v441
    %570 = vmatprep.subr.bf16.mxu0 0
    %571 = vmatpush1.bf16.msra.mxu0 %v442
    %572 = vmatprep.subr.bf16.mxu0 0
    %573 = vmatpush1.bf16.msra.mxu0 %v443
    %574 = vmatprep.subr.bf16.mxu0 0
    %575 = vmatpush1.bf16.msra.mxu0 %v444
    %576 = vmatprep.subr.bf16.mxu0 0
    %577 = vmatpush1.bf16.msra.mxu0 %v445
    %578 = vmatprep.subr.bf16.mxu0 0
    %579 = vmatpush1.bf16.msra.mxu0 %v446
    %580 = vmatprep.subr.bf16.mxu0 0
    %581 = vmatpush1.bf16.msra.mxu0 %v447
    %582 = vmatprep.subr.bf16.mxu0 0
    %583 = vmatpush1.bf16.msra.mxu0 %v448
    %584 = vmatprep.subr.bf16.mxu0 0
    %585 = vmatpush1.bf16.msra.mxu0 %v449
    %586 = vmatprep.subr.bf16.mxu0 0
    %587 = vmatpush1.bf16.msra.mxu0 %v450
    %588 = vmatprep.subr.bf16.mxu0 0
    %589 = vmatpush1.bf16.msra.mxu0 %v451
    %590 = vmatprep.subr.bf16.mxu0 0
    %591 = vmatpush1.bf16.msra.mxu0 %v452
    %592 = vmatprep.subr.bf16.mxu0 0
    %593 = vmatpush1.bf16.msra.mxu0 %v453
    %594 = vmatprep.subr.bf16.mxu0 0
    %595 = vmatpush1.bf16.msra.mxu0 %v454
    %596 = vmatprep.subr.bf16.mxu0 0
    %597 = vmatpush1.bf16.msra.mxu0 %v455
    %598 = vmatprep.mubr.bf16.mxu0 %v119
    %599 = vmatmul.mubr.bf16.gmra.mrb[0].mxu0 %v118
    %v600 = vpop.f32.mrb[0].mxu0
    %v601 = vadd.f32 %v561, %v600
    %v602 = vpop.f32.mrb[0].mxu0
    %v603 = vpop.f32.mrb[0].mxu0
    %v604 = vpop.f32.mrb[0].mxu0
    %605 = vdwg.mxu0
    %606 = vmatprep.subr.bf16.mxu0 0
    %607 = vmatpush1.bf16.msra.mxu0 %v456
    %608 = vmatprep.subr.bf16.mxu0 0
    %609 = vmatpush1.bf16.msra.mxu0 %v457
    %610 = vmatprep.subr.bf16.mxu0 0
    %611 = vmatpush1.bf16.msra.mxu0 %v458
    %612 = vmatprep.subr.bf16.mxu0 0
    %613 = vmatpush1.bf16.msra.mxu0 %v459
    %614 = vmatprep.subr.bf16.mxu0 0
    %615 = vmatpush1.bf16.msra.mxu0 %v460
    %616 = vmatprep.subr.bf16.mxu0 0
    %617 = vmatpush1.bf16.msra.mxu0 %v461
    %618 = vmatprep.subr.bf16.mxu0 0
    %619 = vmatpush1.bf16.msra.mxu0 %v462
    %620 = vmatprep.subr.bf16.mxu0 0
    %621 = vmatpush1.bf16.msra.mxu0 %v463
    %622 = vmatprep.subr.bf16.mxu0 0
    %623 = vmatpush1.bf16.msra.mxu0 %v464
    %624 = vmatprep.subr.bf16.mxu0 0
    %625 = vmatpush1.bf16.msra.mxu0 %v465
    %626 = vmatprep.subr.bf16.mxu0 0
    %627 = vmatpush1.bf16.msra.mxu0 %v466
    %628 = vmatprep.subr.bf16.mxu0 0
    %629 = vmatpush1.bf16.msra.mxu0 %v467
    %630 = vmatprep.subr.bf16.mxu0 0
    %631 = vmatpush1.bf16.msra.mxu0 %v468
    %632 = vmatprep.subr.bf16.mxu0 0
    %633 = vmatpush1.bf16.msra.mxu0 %v469
    %634 = vmatprep.subr.bf16.mxu0 0
    %635 = vmatpush1.bf16.msra.mxu0 %v470
    %636 = vmatprep.subr.bf16.mxu0 0
    %637 = vmatpush1.bf16.msra.mxu0 %v471
    %638 = vmatprep.mubr.bf16.mxu0 %v121
    %639 = vmatmul.mubr.bf16.gmra.mrb[0].mxu0 %v120
    %v640 = vpop.f32.mrb[0].mxu0
    %v641 = vadd.f32 %v601, %v640
    %v642 = vpop.f32.mrb[0].mxu0
    %v643 = vpop.f32.mrb[0].mxu0
    %v644 = vpop.f32.mrb[0].mxu0
    %645 = vdwg.mxu0
    %646 = vmatprep.subr.bf16.mxu0 0
    %647 = vmatpush1.bf16.msra.mxu0 %v472
    %648 = vmatprep.subr.bf16.mxu0 0
    %649 = vmatpush1.bf16.msra.mxu0 0
    %650 = vmatprep.subr.bf16.mxu0 0
    %651 = vmatpush1.bf16.msra.mxu0 0
    %652 = vmatprep.subr.bf16.mxu0 0
    %653 = vmatpush1.bf16.msra.mxu0 0
    %654 = vmatprep.subr.bf16.mxu0 0
    %655 = vmatpush1.bf16.msra.mxu0 0
    %656 = vmatprep.subr.bf16.mxu0 0
    %657 = vmatpush1.bf16.msra.mxu0 0
    %658 = vmatprep.subr.bf16.mxu0 0
    %659 = vmatpush1.bf16.msra.mxu0 0
    %660 = vmatprep.subr.bf16.mxu0 0
    %661 = vmatpush1.bf16.msra.mxu0 0
    %662 = vmatprep.subr.bf16.mxu0 0
    %663 = vmatpush1.bf16.msra.mxu0 0
    %664 = vmatprep.subr.bf16.mxu0 0
    %665 = vmatpush1.bf16.msra.mxu0 0
    %666 = vmatprep.subr.bf16.mxu0 0
    %667 = vmatpush1.bf16.msra.mxu0 0
    %668 = vmatprep.subr.bf16.mxu0 0
    %669 = vmatpush1.bf16.msra.mxu0 0
    %670 = vmatprep.subr.bf16.mxu0 0
    %671 = vmatpush1.bf16.msra.mxu0 0
    %672 = vmatprep.subr.bf16.mxu0 0
    %673 = vmatpush1.bf16.msra.mxu0 0
    %674 = vmatprep.subr.bf16.mxu0 0
    %675 = vmatpush1.bf16.msra.mxu0 0
    %676 = vmatprep.subr.bf16.mxu0 0
    %677 = vmatpush1.bf16.msra.mxu0 0
    %678 = vmatprep.mubr.bf16.mxu0 0
    %679 = vmatmul.mubr.bf16.gmra.mrb[0].mxu0 %v524
    %v680 = vpop.f32.mrb[0].mxu0
    %v681 = vadd.f32 %v641, %v680
    %v682 = vpop.f32.mrb[0].mxu0
    %v683 = vpop.f32.mrb[0].mxu0
    %v684 = vpop.f32.mrb[0].mxu0
    %685 = vdwg.mxu0
    %v686 = vmax.f32 %v681, 0.0
    %v687 = vpack.c.bf16 %v686, %v686
    %v688 = vld [vmem:[%s3] sm:$0xf]
    %v689 = vld [vmem:[%s3 + $0x4] sm:$0xf]
    %v690 = vld [vmem:[%s3 + $0x8] sm:$0xf]
    %v691 = vld [vmem:[%s3 + $0xc] sm:$0x7]
    %v692 = vld [vmem:[%s4] sm:$0x1]
    %v694 = vlaneseq
    %v695 = vshrl.u32 %v694, 7
    %v696 = vsub.s32 0, %v695
    %v697 = vrot.slane %v692, %v696
    %v703 = vunpack.c.l.b16 %v688
    %v704 = vunpack.c.l.b16 %v689
    %v705 = vunpack.c.l.b16 %v690
    %v706 = vunpack.c.l.b16 %v691
    %v707 = vpack.c.b16 %v704, %v703
    %v708 = vpack.c.b16 %v706, %v705
    %vm710 = vcmask 244736
    %v712 = vsel %vm710, %v687, 0
    %vm714 = vcmask 1046528
    %v716 = vsel %vm714, %v708, 0
    %718 = vmatprep.subr.bf16.mxu0 0
    %719 = vmatpush1.bf16.msra.mxu0 %v707
    %720 = vmatprep.subr.bf16.mxu0 0
    %721 = vmatpush1.bf16.msra.mxu0 %v716
    %722 = vmatprep.subr.bf16.mxu0 0
    %723 = vmatpush1.bf16.msra.mxu0 0
    %724 = vmatprep.subr.bf16.mxu0 0
    %725 = vmatpush1.bf16.msra.mxu0 0
    %726 = vmatprep.subr.bf16.mxu0 0
    %727 = vmatpush1.bf16.msra.mxu0 0
    %728 = vmatprep.subr.bf16.mxu0 0
    %729 = vmatpush1.bf16.msra.mxu0 0
    %730 = vmatprep.subr.bf16.mxu0 0
    %731 = vmatpush1.bf16.msra.mxu0 0
    %732 = vmatprep.subr.bf16.mxu0 0
    %733 = vmatpush1.bf16.msra.mxu0 0
    %734 = vmatprep.subr.bf16.mxu0 0
    %735 = vmatpush1.bf16.msra.mxu0 0
    %736 = vmatprep.subr.bf16.mxu0 0
    %737 = vmatpush1.bf16.msra.mxu0 0
    %738 = vmatprep.subr.bf16.mxu0 0
    %739 = vmatpush1.bf16.msra.mxu0 0
    %740 = vmatprep.subr.bf16.mxu0 0
    %741 = vmatpush1.bf16.msra.mxu0 0
    %742 = vmatprep.subr.bf16.mxu0 0
    %743 = vmatpush1.bf16.msra.mxu0 0
    %744 = vmatprep.subr.bf16.mxu0 0
    %745 = vmatpush1.bf16.msra.mxu0 0
    %746 = vmatprep.subr.bf16.mxu0 0
    %747 = vmatpush1.bf16.msra.mxu0 0
    %748 = vmatprep.subr.bf16.mxu0 0
    %749 = vmatpush1.bf16.msra.mxu0 0
    %750 = vmatprep.mubr.bf16.mxu0 0
    %751 = vmatmul.mubr.bf16.gmra.mrb[0].mxu0 %v712
    %v752 = vpop.f32.mrb[0].mxu0
    %v753 = vadd.f32 %v697, %v752
    %v754 = vpop.f32.mrb[0].mxu0
    %v755 = vpop.f32.mrb[0].mxu0
    %v756 = vpop.f32.mrb[0].mxu0
    %757 = vdwg.mxu0
    %vm758 = vcmask 80896
    %v759 = vsel %vm758, %v753, -inf
    %760 = vmax.xlane.f32.xlu0 %v759
    %v761 = vpop.xlane.xlu0 %760
    %v762 = vsub.f32 %v753, %v761
    %v763 = vmul.f32 %v762, 1.442695
    %v764 = vpow.pop %v763
    %v765 = vsel %vm758, %v764, 0.0
    %766 = vadd.xlane.f32.xlu0 %v765
    %v767 = vpop.xlane.xlu0 %766
    %v768 = vrcp.pop %v767
    %v769 = vmul.f32 %v764, %v768
    %770 = vst.msk [vmem:[#allocation2] sm:$0xff] %vm758, %v769
    // Predicated region
    $region22: #{mnist_encoder_forward.1} parent=1 // pred_check
      _
    $region23: #{mnist_encoder_forward.1} parent=1 // pred_check_branch
      %772 = sbr.rel (0) target = $region25
    $region24: #{mnist_encoder_forward.1} parent=1 // pred_region
      %s774 = ssub.s32 128, 32
      %775 = vsyncadd [#allocation3], %s774
      %s776 = sshll.u32 [#allocation2], 4
      %s777 = int_to_ptr.vmem [resolvable:$true] %s776
      %782 = dma.vmem_to_hbm [thread:$0]  %s777, 32, %s5, [#allocation3], 32, 32, 2
    $region25: #{mnist_encoder_forward.1} parent=1 // pred_fallthru
      _
    // Predicated region
    $region26: #{mnist_encoder_forward.1} parent=1 // pred_check
      _
    $region27: #{mnist_encoder_forward.1} parent=1 // pred_check_branch
      %784 = sbr.rel (0) target = $region29
    $region28: #{mnist_encoder_forward.1} parent=1 // pred_region
      %785 = dma.done [#allocation3], 128
    $region29: #{mnist_encoder_forward.1} parent=1 // pred_fallthru
      _
    %786 = vsyncpa [#allocation3], 1

</llo_original>
